<compile_context>
chip_gen: v5e
topology: v5e:2x2
jax: 0.10.0
libtpu: 0.0.40
codegen_flags: <defaults>
</compile_context>

<pallas_src>
import math

import jax
import jax.numpy as jnp
import numpy as np
from jax.experimental import pallas as pl
from jax.experimental.pallas import tpu as pltpu


def _round_up(v, m):
    return -(-v // m) * m


def _sinusoidal_position_embedding(num_pos, d_model):
    # Matches PatchTST's PositionalEmbedding (max_len truncated to num_pos).
    position = np.arange(num_pos, dtype=np.float32)[:, None]
    div_term = np.exp(np.arange(0, d_model, 2, dtype=np.float32)
                      * -(math.log(10000.0) / d_model))
    pe = np.zeros((num_pos, d_model), dtype=np.float32)
    pe[:, 0::2] = np.sin(position * div_term)
    pe[:, 1::2] = np.cos(position * div_term)
    return jnp.asarray(pe)


def _pick_bn_block(bn8, p_pad, n_chunks, stride, d, out_bytes,
                   vmem_tile_budget=36 * 1024 * 1024):
    """BN rows per grid step: multiple of 8, ~1-4 MB output tiles, VMEM-bounded."""
    lane_d = _round_up(d, 128)
    out_row = p_pad * lane_d * out_bytes                         # out tile bytes / row
    in_row = _round_up(n_chunks, 8) * _round_up(stride, 128) * 4  # chunked input (lane padded)
    acc_row = p_pad * lane_d * 4                                  # f32 accumulator value
    per_row = 2 * (in_row + out_row) + 2 * acc_row                # double-buffered I/O + temps
    cap_vmem = max(8, vmem_tile_budget // max(per_row, 1))
    cap_tile = max(8, (4 * 1024 * 1024) // max(out_row, 1))       # <= ~4 MB output tile
    bnb = max(8, min(bn8, cap_vmem, cap_tile))
    bnb = (bnb // 8) * 8
    while bn8 % bnb and bnb > 8:          # prefer a divisor of BN: no padded rows
        bnb -= 8
    # Prefer >=4 grid steps (pipeline overlap; keeps both v7x TensorCores busy)
    # but never shrink output tiles below ~1 MB (v5e/v6e single-TC guidance).
    while bn8 // bnb < 4 and bnb > 8:
        half = ((bnb // 2) // 8) * 8
        if half < 8 or half * out_row < (1 * 1024 * 1024) or bn8 % half:
            break
        bnb = half
    return bnb


def patch_embedding_forward(x, w_value, *, patch_len, stride, padding,
                            out_dtype=None, bn_block=None):
    """x: (B, V, T).  w_value: (patch_len, d_model) = PyTorch Linear weight.T.

    Returns (embedding of shape (B*V, num_patches, d_model), n_vars).
    """
    B, V, T = x.shape
    L, D = w_value.shape
    assert L == patch_len
    assert D % 2 == 0, "sinusoidal position embedding requires even d_model"
    out_dtype = x.dtype if out_dtype is None else out_dtype
    out_bytes = jnp.dtype(out_dtype).itemsize

    Tp = T + padding
    assert Tp >= patch_len, "seq_len + padding must be >= patch_len"
    P = (Tp - patch_len) // stride + 1            # torch.unfold formula
    BN = B * V
    P_pad = _round_up(P, 8)                       # layout-friendly patch count
    r = -(-patch_len // stride)                   # chunks spanned by one patch
    NC = P_pad + r - 1                            # stride-wide chunks per series row
    total = NC * stride                           # chunked row length

    # Replication pad (single cheap input-sized XLA pass) + row-major chunk
    # reshape (free).  The unfold itself stays fused in the kernel.
    # TODO(synk): the pad/cast could also be folded into the kernel (minor win,
    # input traffic is ~1/8..1/32 of the output writeback).
    xf = x.reshape(BN, T).astype(jnp.float32)
    if total > T:
        tail = jnp.broadcast_to(xf[:, -1:], (BN, total - T))   # replicate last value
        xf = jnp.concatenate([xf, tail], axis=-1)
    elif total < T:
        xf = xf[:, :total]                        # tail never read by any valid patch
    x_chunks = xf.reshape(BN, NC, stride)

    w = w_value.astype(jnp.float32)               # (L, D)
    pos = _sinusoidal_position_embedding(P, D)    # (P, D) f32
    if P_pad != P:
        pos = jnp.pad(pos, ((0, P_pad - P), (0, 0)))

    BN8 = _round_up(BN, 8)
    if bn_block is not None:
        BNb = max(8, min(_round_up(int(bn_block), 8), BN8))
    else:
        BNb = _pick_bn_block(BN8, P_pad, NC, stride, D, out_bytes)
    BN_pad = _round_up(BN, BNb)
    if BN_pad != BN:
        x_chunks = jnp.pad(x_chunks, ((0, BN_pad - BN), (0, 0), (0, 0)))
    grid = (BN_pad // BNb,)

    def kernel(xc_ref, w_ref, pos_ref, out_ref):
        # xc_ref : (BNb, NC, stride) f32 — chunked padded series rows
        # w_ref  : (L, D) f32          pos_ref: (P_pad, D) f32
        # out_ref: (BNb, P_pad, D) out_dtype
        m = BNb * P_pad
        acc = None
        for j in range(r):                                   # r = ceil(L/stride)
            width = min(stride, patch_len - j * stride)
            # Fused unfold: sublane slice of the chunked block, reshaped to a
            # dense (BNb*P_pad, width) matmul LHS (free merge: P_pad % 8 == 0).
            lhs = xc_ref[:, j:j + P_pad, :width].reshape(m, width)
            wj = w_ref[j * stride:j * stride + width, :]
            term = jnp.dot(lhs, wj, preferred_element_type=jnp.float32)   # MXU
            acc = term if acc is None else acc + term
        y = acc.reshape(BNb, P_pad, D) + pos_ref[...][None, :, :]
        out_ref[...] = y.astype(out_ref.dtype)               # one dense store

    out = pl.pallas_call(
        kernel,
        out_shape=jax.ShapeDtypeStruct((BN_pad, P_pad, D), out_dtype),
        grid=grid,
        in_specs=[
            pl.BlockSpec((BNb, NC, stride), lambda i: (i, 0, 0)),   # chunked series
            pl.BlockSpec((L, D), lambda i: (0, 0)),                 # value-embedding W
            pl.BlockSpec((P_pad, D), lambda i: (0, 0)),             # positional table
        ],
        out_specs=pl.BlockSpec((BNb, P_pad, D), lambda i: (i, 0, 0)),
        compiler_params=pltpu.CompilerParams(
            dimension_semantics=("parallel",),
            vmem_limit_bytes=48 * 1024 * 1024,   # fits v7x 64 MiB/TC; ample on v5e/v6e
        ),
    )(x_chunks, w, pos)

    if BN_pad != BN or P_pad != P:
        out = out[:BN, :P, :]
    # TODO(synk): nn.Dropout applied as identity (eval mode); training-mode masking
    # would use pltpu.prng_seed + pltpu.stateful_bernoulli on the output tile.
    return out, V


if __name__ == "__main__":
    # Small, module-consistent shapes: BN = 16 rows, P = 8 patches, d_model = 128.
    batch, n_vars, seq_len = 2, 8, 64
    d_model, patch_len, stride, padding = 128, 16, 8, 8

    key = jax.random.PRNGKey(0)
    kx, kw = jax.random.split(key)
    x = jax.random.normal(kx, (batch, n_vars, seq_len), dtype=jnp.float32)

    # Deterministic Linear(patch_len, d_model, bias=False) weight.
    # PyTorch stores (d_model, patch_len); the kernel consumes its transpose (L, D).
    bound = 1.0 / math.sqrt(patch_len)
    w_torch_layout = jax.random.uniform(
        kw, (d_model, patch_len), minval=-bound, maxval=bound, dtype=jnp.float32)
    w_value = w_torch_layout.T                                      # (L, D)

    out, nv = patch_embedding_forward(
        x, w_value, patch_len=patch_len, stride=stride, padding=padding)
    out = jax.block_until_ready(out)

    # Pure-JAX reference of the same semantics (pad -> unfold -> linear + pos).
    pad_tail = jnp.repeat(x[..., -1:], padding, axis=-1)
    x_pad_ref = jnp.concatenate([x, pad_tail], axis=-1)
    P = (seq_len + padding - patch_len) // stride + 1
    idx = (jnp.arange(P) * stride)[:, None] + jnp.arange(patch_len)[None, :]
    patches_ref = x_pad_ref[:, :, idx].reshape(batch * n_vars, P, patch_len)
    ref = patches_ref @ w_value + _sinusoidal_position_embedding(P, d_model)[None]

    np.testing.assert_allclose(np.asarray(out), np.asarray(ref), rtol=1e-4, atol=1e-4)
    assert nv == n_vars
    assert out.shape == (batch * n_vars, P, d_model)

    # Exercise the multi-block grid path (two BN blocks of 8 rows) — same numerics.
    out2, _ = patch_embedding_forward(
        x, w_value, patch_len=patch_len, stride=stride, padding=padding, bn_block=8)
    out2 = jax.block_until_ready(out2)
    np.testing.assert_allclose(np.asarray(out2), np.asarray(ref), rtol=1e-4, atol=1e-4)

    # bf16 output option (halves the dominant HBM writeback) — loose check.
    out_bf16, _ = patch_embedding_forward(
        x, w_value, patch_len=patch_len, stride=stride, padding=padding,
        out_dtype=jnp.bfloat16)
    out_bf16 = jax.block_until_ready(out_bf16)
    np.testing.assert_allclose(np.asarray(out_bf16).astype(np.float32),
                               np.asarray(ref), rtol=5e-2, atol=5e-2)

    print("KERNEL_OK")
</pallas_src>

<mosaic_0001>
module attributes {stable_mosaic.version = 11 : i64} {
  func.func @kernel(%arg0: i32, %arg1: memref<16x9x8xf32, #tpu.memory_space<vmem>>, %arg2: memref<16x128xf32, #tpu.memory_space<vmem>>, %arg3: memref<8x128xf32, #tpu.memory_space<vmem>>, %arg4: memref<16x8x128xf32, #tpu.memory_space<vmem>>) attributes {dimension_semantics = [#tpu.dimension_semantics<parallel>], iteration_bounds = array<i64: 1>, scalar_prefetch = 0 : i64, scratch_operands = 0 : i64, tpu.core_type = #tpu.core_type<tc>, window_params = [{transform_indices = @transform_0, window_bounds = array<i64: 16, 9, 8>}, {pipeline_mode = #tpu.pipeline_mode<synchronous>, transform_indices = @transform_1, window_bounds = array<i64: 16, 128>}, {pipeline_mode = #tpu.pipeline_mode<synchronous>, transform_indices = @transform_2, window_bounds = array<i64: 8, 128>}, {transform_indices = @transform_3, window_bounds = array<i64: 16, 8, 128>}]} {
    %c0 = arith.constant 0 : index
    %c0_0 = arith.constant 0 : index
    %c0_1 = arith.constant 0 : index
    %0 = vector.load %arg1[%c0, %c0_0, %c0_1] : memref<16x9x8xf32, #tpu.memory_space<vmem>>, vector<16x8x8xf32>
    %1 = vector.shape_cast %0 : vector<16x8x8xf32> to vector<128x8xf32>
    %c0_2 = arith.constant 0 : index
    %c0_3 = arith.constant 0 : index
    %2 = vector.load %arg2[%c0_2, %c0_3] : memref<16x128xf32, #tpu.memory_space<vmem>>, vector<8x128xf32>
    %cst = arith.constant dense<0.000000e+00> : vector<128x128xf32>
    %3 = tpu.matmul %1, %2, %cst {dimension_numbers = #tpu.dot_dimension_numbers<[1], [0], [0], [1], [0, 0, 1, 1], [], []>} : vector<128x8xf32>, vector<8x128xf32>, vector<128x128xf32> -> vector<128x128xf32>
    %c0_4 = arith.constant 0 : index
    %c1 = arith.constant 1 : index
    %c0_5 = arith.constant 0 : index
    %4 = vector.load %arg1[%c0_4, %c1, %c0_5] : memref<16x9x8xf32, #tpu.memory_space<vmem>>, vector<16x8x8xf32>
    %5 = vector.shape_cast %4 : vector<16x8x8xf32> to vector<128x8xf32>
    %c8 = arith.constant 8 : index
    %c0_6 = arith.constant 0 : index
    %6 = vector.load %arg2[%c8, %c0_6] : memref<16x128xf32, #tpu.memory_space<vmem>>, vector<8x128xf32>
    %cst_7 = arith.constant dense<0.000000e+00> : vector<128x128xf32>
    %7 = tpu.matmul %5, %6, %cst_7 {dimension_numbers = #tpu.dot_dimension_numbers<[1], [0], [0], [1], [0, 0, 1, 1], [], []>} : vector<128x8xf32>, vector<8x128xf32>, vector<128x128xf32> -> vector<128x128xf32>
    %8 = arith.addf %3, %7 : vector<128x128xf32>
    %9 = vector.shape_cast %8 : vector<128x128xf32> to vector<16x8x128xf32>
    %c0_8 = arith.constant 0 : index
    %c0_9 = arith.constant 0 : index
    %10 = vector.load %arg3[%c0_8, %c0_9] : memref<8x128xf32, #tpu.memory_space<vmem>>, vector<8x128xf32>
    %11 = vector.shape_cast %10 : vector<8x128xf32> to vector<1x8x128xf32>
    %12 = vector.broadcast %11 : vector<1x8x128xf32> to vector<16x8x128xf32>
    %13 = arith.addf %9, %12 : vector<16x8x128xf32>
    %c0_10 = arith.constant 0 : index
    %c0_11 = arith.constant 0 : index
    %c0_12 = arith.constant 0 : index
    %14 = vector.load %arg4[%c0_10, %c0_11, %c0_12] : memref<16x8x128xf32, #tpu.memory_space<vmem>>, vector<16x8x128xf32>
    tpu.vector_store %arg4[%c0_10, %c0_11, %c0_12], %13 {strides = array<i32>} : memref<16x8x128xf32, #tpu.memory_space<vmem>>, vector<16x8x128xf32>,
    return
  }
  func.func @transform_0(%arg0: i32) -> (i32, i32, i32) {
    %c0_i32 = arith.constant 0 : i32
    %c0_i32_0 = arith.constant 0 : i32
    %c0_i32_1 = arith.constant 0 : i32
    return %arg0, %c0_i32, %c0_i32_0 : i32, i32, i32
  }
  func.func @transform_1(%arg0: i32) -> (i32, i32) {
    %c0_i32 = arith.constant 0 : i32
    %c0_i32_0 = arith.constant 0 : i32
    %c0_i32_1 = arith.constant 0 : i32
    return %c0_i32, %c0_i32_0 : i32, i32
  }
  func.func @transform_2(%arg0: i32) -> (i32, i32) {
    %c0_i32 = arith.constant 0 : i32
    %c0_i32_0 = arith.constant 0 : i32
    %c0_i32_1 = arith.constant 0 : i32
    return %c0_i32, %c0_i32_0 : i32, i32
  }
  func.func @transform_3(%arg0: i32) -> (i32, i32, i32) {
    %c0_i32 = arith.constant 0 : i32
    %c0_i32_0 = arith.constant 0 : i32
    %c0_i32_1 = arith.constant 0 : i32
    return %arg0, %c0_i32, %c0_i32_0 : i32, i32, i32
  }
}

</mosaic_0001>

<llo_original>
// kernel: tpu_custom_call.1
$region0: #{tpu_custom_call.1}
  #allocation0 [shape = 'u32[]', space=smem, size = 0x4, offset = 0x4, fixed_abs, tag = 'smem constant byte address 0x4 - core index']
  #allocation1 [shape = 'u32[72,128]{1,0:T(1,128)}', space=vmem, size = 0x9000, scoped, tag = 'internal scratch']
  %s0 = inlined_call_operand.vmem [shape: f32[16,9,8], index: 0, kind: input, shape index: {}]
  %s1 = inlined_call_operand.vmem [shape: f32[16,128], index: 1, kind: input, shape index: {}]
  %s2 = inlined_call_operand.vmem [shape: f32[8,128], index: 2, kind: input, shape index: {}]
  %s3 = inlined_call_operand.hbm [shape: f32[16,8,128], index: 3, kind: output, shape index: {}]
  %s4 = sld [smem:[#allocation0]]
  $region22: #{tpu_custom_call.1} parent=0
    _
  %s6 = ssub.s32 1, %s4
  %s7 = scalar_select 0, %s6, %s4
  $region1: #{tpu_custom_call.1} parent=0
    #allocation2 [shape = 'u8[65536]{0}', space=vmem, size = 0x10000, scoped, tag = 'output window, operand 0, single buffered']
    #allocation3 [shape = 's32[1]{0}', space=sflag, size = 0x4, scoped, tag = 'scoped memory for tpu_custom_call.1']
    %8 = vsyncpa [#allocation3], 0
    // Predicated region
    $region2: #{tpu_custom_call.1} parent=1 // pred_check
      _
    $region3: #{tpu_custom_call.1} parent=1 // pred_check_branch
      %10 = sbr.rel (0) target = $region5
    $region4: #{tpu_custom_call.1} parent=1 // pred_region
      _
    $region5: #{tpu_custom_call.1} parent=1 // pred_fallthru
      _
    // Predicated region
    $region6: #{tpu_custom_call.1} parent=1 // pred_check
      _
    $region7: #{tpu_custom_call.1} parent=1 // pred_check_branch
      %12 = sbr.rel (0) target = $region9
    $region8: #{tpu_custom_call.1} parent=1 // pred_region
      _
    $region9: #{tpu_custom_call.1} parent=1 // pred_fallthru
      _
    // Predicated region
    $region10: #{tpu_custom_call.1} parent=1 // pred_check
      _
    $region11: #{tpu_custom_call.1} parent=1 // pred_check_branch
      %14 = sbr.rel (0) target = $region13
    $region12: #{tpu_custom_call.1} parent=1 // pred_region
      _
    $region13: #{tpu_custom_call.1} parent=1 // pred_fallthru
      _
    %v15 = vld [vmem:[%s0] sm:$0xff]
    %v16 = vld [vmem:[%s0 + $0x10] sm:$0xff]
    %v17 = vld [vmem:[%s0 + $0x20] sm:$0xff]
    %v18 = vld [vmem:[%s0 + $0x30] sm:$0xff]
    %v19 = vld [vmem:[%s0 + $0x40] sm:$0xff]
    %v20 = vld [vmem:[%s0 + $0x50] sm:$0xff]
    %v21 = vld [vmem:[%s0 + $0x60] sm:$0xff]
    %v22 = vld [vmem:[%s0 + $0x70] sm:$0xff]
    %v23 = vld [vmem:[%s0 + $0x80] sm:$0xff]
    %v24 = vld [vmem:[%s0 + $0x90] sm:$0xff]
    %v25 = vld [vmem:[%s0 + $0xa0] sm:$0xff]
    %v26 = vld [vmem:[%s0 + $0xb0] sm:$0xff]
    %v27 = vld [vmem:[%s0 + $0xc0] sm:$0xff]
    %v28 = vld [vmem:[%s0 + $0xd0] sm:$0xff]
    %v29 = vld [vmem:[%s0 + $0xe0] sm:$0xff]
    %v30 = vld [vmem:[%s0 + $0xf0] sm:$0xff]
    %v31 = vld [vmem:[%s1] sm:$0xff]
    %v32 = vld [vmem:[%s0 + $0x1] sm:$0xff]
    %v33 = vld [vmem:[%s0 + $0x11] sm:$0xff]
    %v34 = vld [vmem:[%s0 + $0x21] sm:$0xff]
    %v35 = vld [vmem:[%s0 + $0x31] sm:$0xff]
    %v36 = vld [vmem:[%s0 + $0x41] sm:$0xff]
    %v37 = vld [vmem:[%s0 + $0x51] sm:$0xff]
    %v38 = vld [vmem:[%s0 + $0x61] sm:$0xff]
    %v39 = vld [vmem:[%s0 + $0x71] sm:$0xff]
    %v40 = vld [vmem:[%s0 + $0x81] sm:$0xff]
    %v41 = vld [vmem:[%s0 + $0x91] sm:$0xff]
    %v42 = vld [vmem:[%s0 + $0xa1] sm:$0xff]
    %v43 = vld [vmem:[%s0 + $0xb1] sm:$0xff]
    %v44 = vld [vmem:[%s0 + $0xc1] sm:$0xff]
    %v45 = vld [vmem:[%s0 + $0xd1] sm:$0xff]
    %v46 = vld [vmem:[%s0 + $0xe1] sm:$0xff]
    %v47 = vld [vmem:[%s0 + $0xf1] sm:$0xff]
    %v48 = vld [vmem:[%s1 + $0x8] sm:$0xff]
    %vm49 = vcmask 64512
    %v51 = vsel %vm49, %v32, 0
    %v54 = vsel %vm49, %v33, 0
    %v57 = vsel %vm49, %v34, 0
    %v60 = vsel %vm49, %v35, 0
    %v63 = vsel %vm49, %v36, 0
    %v66 = vsel %vm49, %v37, 0
    %v69 = vsel %vm49, %v38, 0
    %v72 = vsel %vm49, %v39, 0
    %v75 = vsel %vm49, %v40, 0
    %v78 = vsel %vm49, %v41, 0
    %v81 = vsel %vm49, %v42, 0
    %v84 = vsel %vm49, %v43, 0
    %v87 = vsel %vm49, %v44, 0
    %v90 = vsel %vm49, %v45, 0
    %v93 = vsel %vm49, %v46, 0
    %v96 = vsel %vm49, %v47, 0
    %98 = vmatpush.msra.mxu0 0.0
    %99 = vmatpush.msra.mxu0 0.0
    %100 = vmatpush.msra.mxu0 0.0
    %101 = vmatpush.msra.mxu0 0.0
    %102 = vmatpush.msra.mxu0 0.0
    %103 = vmatpush.msra.mxu0 0.0
    %104 = vmatpush.msra.mxu0 0.0
    %105 = vmatpush.msra.mxu0 0.0
    %106 = vmatpush.msra.mxu0 0.0
    %107 = vmatpush.msra.mxu0 0.0
    %108 = vmatpush.msra.mxu0 0.0
    %109 = vmatpush.msra.mxu0 0.0
    %110 = vmatpush.msra.mxu0 0.0
    %111 = vmatpush.msra.mxu0 0.0
    %112 = vmatpush.msra.mxu0 0.0
    %113 = vmatpush.msra.mxu0 %v48
    %114 = vmatmul.f32.gmra.mxu0 %v51
    %v115 = vpop.f32.mrf.mxu0
    %v116 = vadd.f32 0.0, %v115
    %117 = vmatmul.f32.gmra.mxu0 %v54
    %v118 = vpop.f32.mrf.mxu0
    %v119 = vadd.f32 0.0, %v118
    %120 = vmatmul.f32.gmra.mxu0 %v57
    %v121 = vpop.f32.mrf.mxu0
    %v122 = vadd.f32 0.0, %v121
    %123 = vmatmul.f32.gmra.mxu0 %v60
    %v124 = vpop.f32.mrf.mxu0
    %v125 = vadd.f32 0.0, %v124
    %126 = vmatmul.f32.gmra.mxu0 %v63
    %v127 = vpop.f32.mrf.mxu0
    %v128 = vadd.f32 0.0, %v127
    %129 = vmatmul.f32.gmra.mxu0 %v66
    %v130 = vpop.f32.mrf.mxu0
    %v131 = vadd.f32 0.0, %v130
    %132 = vmatmul.f32.gmra.mxu0 %v69
    %v133 = vpop.f32.mrf.mxu0
    %v134 = vadd.f32 0.0, %v133
    %135 = vmatmul.f32.gmra.mxu0 %v72
    %v136 = vpop.f32.mrf.mxu0
    %v137 = vadd.f32 0.0, %v136
    %138 = vmatmul.f32.gmra.mxu0 %v75
    %v139 = vpop.f32.mrf.mxu0
    %v140 = vadd.f32 0.0, %v139
    %141 = vmatmul.f32.gmra.mxu0 %v78
    %v142 = vpop.f32.mrf.mxu0
    %v143 = vadd.f32 0.0, %v142
    %144 = vmatmul.f32.gmra.mxu0 %v81
    %v145 = vpop.f32.mrf.mxu0
    %v146 = vadd.f32 0.0, %v145
    %147 = vmatmul.f32.gmra.mxu0 %v84
    %v148 = vpop.f32.mrf.mxu0
    %v149 = vadd.f32 0.0, %v148
    %150 = vmatmul.f32.gmra.mxu0 %v87
    %v151 = vpop.f32.mrf.mxu0
    %v152 = vadd.f32 0.0, %v151
    %153 = vmatmul.f32.gmra.mxu0 %v90
    %v154 = vpop.f32.mrf.mxu0
    %v155 = vadd.f32 0.0, %v154
    %156 = vmatmul.f32.gmra.mxu0 %v93
    %v157 = vpop.f32.mrf.mxu0
    %v158 = vadd.f32 0.0, %v157
    %159 = vmatmul.f32.gmra.mxu0 %v96
    %v160 = vpop.f32.mrf.mxu0
    %v161 = vadd.f32 0.0, %v160
    %162 = vdwg.mxu0
    %v164 = vsel %vm49, %v15, 0
    %v167 = vsel %vm49, %v16, 0
    %v170 = vsel %vm49, %v17, 0
    %v173 = vsel %vm49, %v18, 0
    %v176 = vsel %vm49, %v19, 0
    %v179 = vsel %vm49, %v20, 0
    %v182 = vsel %vm49, %v21, 0
    %v185 = vsel %vm49, %v22, 0
    %v188 = vsel %vm49, %v23, 0
    %v191 = vsel %vm49, %v24, 0
    %v194 = vsel %vm49, %v25, 0
    %v197 = vsel %vm49, %v26, 0
    %v200 = vsel %vm49, %v27, 0
    %v203 = vsel %vm49, %v28, 0
    %v206 = vsel %vm49, %v29, 0
    %v209 = vsel %vm49, %v30, 0
    %211 = vmatpush.msra.mxu0 0.0
    %212 = vmatpush.msra.mxu0 0.0
    %213 = vmatpush.msra.mxu0 0.0
    %214 = vmatpush.msra.mxu0 0.0
    %215 = vmatpush.msra.mxu0 0.0
    %216 = vmatpush.msra.mxu0 0.0
    %217 = vmatpush.msra.mxu0 0.0
    %218 = vmatpush.msra.mxu0 0.0
    %219 = vmatpush.msra.mxu0 0.0
    %220 = vmatpush.msra.mxu0 0.0
    %221 = vmatpush.msra.mxu0 0.0
    %222 = vmatpush.msra.mxu0 0.0
    %223 = vmatpush.msra.mxu0 0.0
    %224 = vmatpush.msra.mxu0 0.0
    %225 = vmatpush.msra.mxu0 0.0
    %226 = vmatpush.msra.mxu0 %v31
    %227 = vmatmul.f32.gmra.mxu0 %v164
    %v228 = vpop.f32.mrf.mxu0
    %v229 = vadd.f32 %v116, %v228
    %230 = vmatmul.f32.gmra.mxu0 %v167
    %v231 = vpop.f32.mrf.mxu0
    %v232 = vadd.f32 %v119, %v231
    %233 = vmatmul.f32.gmra.mxu0 %v170
    %v234 = vpop.f32.mrf.mxu0
    %v235 = vadd.f32 %v122, %v234
    %236 = vmatmul.f32.gmra.mxu0 %v173
    %v237 = vpop.f32.mrf.mxu0
    %v238 = vadd.f32 %v125, %v237
    %239 = vmatmul.f32.gmra.mxu0 %v176
    %v240 = vpop.f32.mrf.mxu0
    %v241 = vadd.f32 %v128, %v240
    %242 = vmatmul.f32.gmra.mxu0 %v179
    %v243 = vpop.f32.mrf.mxu0
    %v244 = vadd.f32 %v131, %v243
    %245 = vmatmul.f32.gmra.mxu0 %v182
    %v246 = vpop.f32.mrf.mxu0
    %v247 = vadd.f32 %v134, %v246
    %248 = vmatmul.f32.gmra.mxu0 %v185
    %v249 = vpop.f32.mrf.mxu0
    %v250 = vadd.f32 %v137, %v249
    %251 = vmatmul.f32.gmra.mxu0 %v188
    %v252 = vpop.f32.mrf.mxu0
    %v253 = vadd.f32 %v140, %v252
    %254 = vmatmul.f32.gmra.mxu0 %v191
    %v255 = vpop.f32.mrf.mxu0
    %v256 = vadd.f32 %v143, %v255
    %257 = vmatmul.f32.gmra.mxu0 %v194
    %v258 = vpop.f32.mrf.mxu0
    %v259 = vadd.f32 %v146, %v258
    %260 = vmatmul.f32.gmra.mxu0 %v197
    %v261 = vpop.f32.mrf.mxu0
    %v262 = vadd.f32 %v149, %v261
    %263 = vmatmul.f32.gmra.mxu0 %v200
    %v264 = vpop.f32.mrf.mxu0
    %v265 = vadd.f32 %v152, %v264
    %266 = vmatmul.f32.gmra.mxu0 %v203
    %v267 = vpop.f32.mrf.mxu0
    %v268 = vadd.f32 %v155, %v267
    %269 = vmatmul.f32.gmra.mxu0 %v206
    %v270 = vpop.f32.mrf.mxu0
    %v271 = vadd.f32 %v158, %v270
    %272 = vmatmul.f32.gmra.mxu0 %v209
    %v273 = vpop.f32.mrf.mxu0
    %v274 = vadd.f32 %v161, %v273
    %275 = vdwg.mxu0
    %v276 = vld [vmem:[%s2] sm:$0xff]
    %v277 = vadd.f32 %v229, %v276
    %v278 = vadd.f32 %v232, %v276
    %v279 = vadd.f32 %v235, %v276
    %v280 = vadd.f32 %v238, %v276
    %v281 = vadd.f32 %v241, %v276
    %v282 = vadd.f32 %v244, %v276
    %v283 = vadd.f32 %v247, %v276
    %v284 = vadd.f32 %v250, %v276
    %v285 = vadd.f32 %v253, %v276
    %v286 = vadd.f32 %v256, %v276
    %v287 = vadd.f32 %v259, %v276
    %v288 = vadd.f32 %v262, %v276
    %v289 = vadd.f32 %v265, %v276
    %v290 = vadd.f32 %v268, %v276
    %v291 = vadd.f32 %v271, %v276
    %v292 = vadd.f32 %v274, %v276
    %293 = vst [vmem:[#allocation2] sm:$0xff] %v277
    %294 = vst [vmem:[#allocation2 + $0x8] sm:$0xff] %v278
    %295 = vst [vmem:[#allocation2 + $0x10] sm:$0xff] %v279
    %296 = vst [vmem:[#allocation2 + $0x18] sm:$0xff] %v280
    %297 = vst [vmem:[#allocation2 + $0x20] sm:$0xff] %v281
    %298 = vst [vmem:[#allocation2 + $0x28] sm:$0xff] %v282
    %299 = vst [vmem:[#allocation2 + $0x30] sm:$0xff] %v283
    %300 = vst [vmem:[#allocation2 + $0x38] sm:$0xff] %v284
    %301 = vst [vmem:[#allocation2 + $0x40] sm:$0xff] %v285
    %302 = vst [vmem:[#allocation2 + $0x48] sm:$0xff] %v286
    %303 = vst [vmem:[#allocation2 + $0x50] sm:$0xff] %v287
    %304 = vst [vmem:[#allocation2 + $0x58] sm:$0xff] %v288
    %305 = vst [vmem:[#allocation2 + $0x60] sm:$0xff] %v289
    %306 = vst [vmem:[#allocation2 + $0x68] sm:$0xff] %v290
    %307 = vst [vmem:[#allocation2 + $0x70] sm:$0xff] %v291
    %308 = vst [vmem:[#allocation2 + $0x78] sm:$0xff] %v292
    // Predicated region
    $region14: #{tpu_custom_call.1} parent=1 // pred_check
      _
    $region15: #{tpu_custom_call.1} parent=1 // pred_check_branch
      %310 = sbr.rel (0) target = $region17
    $region16: #{tpu_custom_call.1} parent=1 // pred_region
      %312 = vsyncadd [#allocation3], 0
      %s313 = sshll.u32 [#allocation2], 4
      %s314 = int_to_ptr.vmem [resolvable:$true] %s313
      %s315 = sshll.u32 %s3, 4
      %s316 = int_to_ptr.hbm [resolvable:$true] %s315
      %321 = dma.vmem_to_hbm [thread:$0]  %s314, 2048, %s316, [#allocation3], 128, 128, 8
    $region17: #{tpu_custom_call.1} parent=1 // pred_fallthru
      _
    // Predicated region
    $region18: #{tpu_custom_call.1} parent=1 // pred_check
      _
    $region19: #{tpu_custom_call.1} parent=1 // pred_check_branch
      %323 = sbr.rel (0) target = $region21
    $region20: #{tpu_custom_call.1} parent=1 // pred_region
      %325 = dma.done [#allocation3], 2048
    $region21: #{tpu_custom_call.1} parent=1 // pred_fallthru
      _
    %326 = vsyncpa [#allocation3], 1

</llo_original>
